<compile_context>
chip_gen: v7x
topology: tpu7x:2x2x1
jax: 0.10.0
libtpu: 0.0.40
codegen_flags: <defaults>
</compile_context>

<pallas_src>
import functools

import jax
import jax.numpy as jnp
from jax.experimental import pallas as pl
from jax.experimental.pallas import tpu as pltpu


def _round_up(x, m):
    return (x + m - 1) // m * m


# ----------------------------------------------------------------------------
# Pallas kernel: tiled matmul with f32 accumulator, bias + ReLU fused epilogue
# ----------------------------------------------------------------------------
def _fc_kernel(a_ref, b_ref, bias_ref, o_ref, acc_ref, *, relu):
    k = pl.program_id(2)

    @pl.when(k == 0)
    def _init():
        acc_ref[...] = jnp.zeros_like(acc_ref)

    acc_ref[...] += jnp.dot(
        a_ref[...], b_ref[...], preferred_element_type=jnp.float32
    )

    @pl.when(k == pl.num_programs(2) - 1)
    def _finalize():
        out = acc_ref[...] + bias_ref[...]          # bias: (1, tn) broadcasts
        if relu:
            out = jnp.maximum(out, 0.0)
        o_ref[...] = out.astype(o_ref.dtype)


def pallas_linear(x, w, b, *, relu=True, compute_dtype=jnp.bfloat16,
                  tm=256, tn=256, tk=512):
    """relu?(x @ w + b).  x: [M, K] f32, w: [K, N] f32, b: [N] f32 -> [M, N] f32.

    GEMM operands are cast to `compute_dtype` (bf16 by default) for the MXU;
    accumulation, bias and the epilogue stay in f32.
    """
    M, K = x.shape
    Kw, N = w.shape
    assert K == Kw, (K, Kw)
    assert b.shape == (N,), b.shape

    # Tile sizes clipped to the (padded) problem, respecting (8,128) minimums.
    tm = max(8, min(tm, _round_up(M, 8)))
    tn = max(128, min(tn, _round_up(N, 128)))
    tk = max(128, min(tk, _round_up(K, 128)))
    Mp, Np, Kp = _round_up(M, tm), _round_up(N, tn), _round_up(K, tk)

    a = x.astype(compute_dtype)
    bmat = w.astype(compute_dtype)
    if (Mp, Kp) != (M, K):
        a = jnp.pad(a, ((0, Mp - M), (0, Kp - K)))
    if (Kp, Np) != (K, N):
        bmat = jnp.pad(bmat, ((0, Kp - K), (0, Np - N)))
    bias = b.astype(jnp.float32).reshape(1, N)
    if Np != N:
        bias = jnp.pad(bias, ((0, 0), (0, Np - N)))

    kernel = functools.partial(_fc_kernel, relu=relu)
    out = pl.pallas_call(
        kernel,
        out_shape=jax.ShapeDtypeStruct((Mp, Np), jnp.float32),
        grid_spec=pltpu.PrefetchScalarGridSpec(
            num_scalar_prefetch=0,
            grid=(Mp // tm, Np // tn, Kp // tk),
            in_specs=[
                pl.BlockSpec((tm, tk), lambda i, j, k: (i, k)),
                pl.BlockSpec((tk, tn), lambda i, j, k: (k, j)),
                # bias block does not depend on k: fetched once per (i, j).
                pl.BlockSpec((1, tn), lambda i, j, k: (0, j)),
            ],
            out_specs=pl.BlockSpec((tm, tn), lambda i, j, k: (i, j)),
            scratch_shapes=[pltpu.VMEM((tm, tn), jnp.float32)],
        ),
        compiler_params=pltpu.CompilerParams(
            dimension_semantics=("parallel", "parallel", "arbitrary"),
            vmem_limit_bytes=32 * 1024 * 1024,   # headroom even on v7x (64 MiB)
        ),
    )(a, bmat, bias)

    if (Mp, Np) != (M, N):
        out = out[:M, :N]
    return out


# ----------------------------------------------------------------------------
# FC module: relu(Linear(in_size, out_size)(x)) with PyTorch weight layout.
# ----------------------------------------------------------------------------
def init_fc_params(key, in_size, out_size):
    wk, bk = jax.random.split(key)
    scale = 1.0 / jnp.sqrt(jnp.float32(in_size))
    w = scale * jax.random.normal(wk, (out_size, in_size), dtype=jnp.float32)
    b = scale * jax.random.normal(bk, (out_size,), dtype=jnp.float32)
    return {"w": w, "b": b}   # PyTorch layout: w [out, in], b [out]


def fc_forward(params, x, *, compute_dtype=jnp.bfloat16):
    # PyTorch Linear: y = x @ w.T + b ; FC adds ReLU.
    return pallas_linear(x, params["w"].T, params["b"],
                         relu=True, compute_dtype=compute_dtype)


def _reference_fc(params, x):
    return jnp.maximum(x @ params["w"].T + params["b"], 0.0)


if __name__ == "__main__":
    key = jax.random.PRNGKey(0)
    k_p1, k_x1, k_p2, k_x2 = jax.random.split(key, 4)

    fwd = jax.jit(fc_forward)

    # Case 1: MXU-friendly small shapes (batch=4, in=512, out=256).
    p1 = init_fc_params(k_p1, 512, 256)
    x1 = jax.random.normal(k_x1, (4, 512), dtype=jnp.float32)
    y1 = fwd(p1, x1)
    jax.block_until_ready(y1)
    assert y1.shape == (4, 256) and y1.dtype == jnp.float32
    ref1 = _reference_fc(p1, x1)
    assert jnp.allclose(y1, ref1, atol=5e-2, rtol=5e-2), \
        float(jnp.max(jnp.abs(y1 - ref1)))
    assert bool(jnp.all(y1 >= 0.0))

    # Case 2: ragged / non-aligned shapes exercise the padding path.
    p2 = init_fc_params(k_p2, 300, 200)
    x2 = jax.random.normal(k_x2, (5, 300), dtype=jnp.float32)
    y2 = fwd(p2, x2)
    jax.block_until_ready(y2)
    assert y2.shape == (5, 200) and y2.dtype == jnp.float32
    ref2 = _reference_fc(p2, x2)
    assert jnp.allclose(y2, ref2, atol=5e-2, rtol=5e-2), \
        float(jnp.max(jnp.abs(y2 - ref2)))
    assert bool(jnp.all(y2 >= 0.0))

    print("KERNEL_OK")
</pallas_src>

<mosaic_0001>
module attributes {stable_mosaic.version = 11 : i64} {
  func.func @_fc_kernel(%arg0: i32, %arg1: i32, %arg2: i32, %arg3: memref<8x512xbf16, #tpu.memory_space<vmem>>, %arg4: memref<512x256xbf16, #tpu.memory_space<vmem>>, %arg5: memref<1x256xf32, #tpu.memory_space<vmem>>, %arg6: memref<8x256xf32, #tpu.memory_space<vmem>>, %arg7: memref<8x256xf32, #tpu.memory_space<vmem>>) attributes {dimension_semantics = [#tpu.dimension_semantics<parallel>, #tpu.dimension_semantics<parallel>, #tpu.dimension_semantics<arbitrary>], iteration_bounds = array<i64: 1, 1, 1>, scalar_prefetch = 0 : i64, scratch_operands = 1 : i64, tpu.core_type = #tpu.core_type<tc>, window_params = [{transform_indices = @transform_0, window_bounds = array<i64: 8, 512>}, {transform_indices = @transform_1, window_bounds = array<i64: 512, 256>}, {transform_indices = @transform_2, window_bounds = array<i64: 1, 256>}, {transform_indices = @transform_3, window_bounds = array<i64: 8, 256>}]} {
    %c0_i32 = arith.constant 0 : i32
    %0 = arith.cmpi eq, %arg2, %c0_i32 : i32
    %1 = arith.extui %0 : i1 to i32
    %c0_i32_0 = arith.constant 0 : i32
    %2 = arith.cmpi ne, %1, %c0_i32_0 : i32
    scf.if %2 {
      %cst_10 = arith.constant 0.000000e+00 : f32
      %12 = vector.broadcast %cst_10 : f32 to vector<8x256xf32>
      %c0_11 = arith.constant 0 : index
      %c0_12 = arith.constant 0 : index
      %13 = vector.load %arg7[%c0_11, %c0_12] : memref<8x256xf32, #tpu.memory_space<vmem>>, vector<8x256xf32>
      tpu.vector_store %arg7[%c0_11, %c0_12], %12 {strides = array<i32>} : memref<8x256xf32, #tpu.memory_space<vmem>>, vector<8x256xf32>,
    } else {
    }
    %c0 = arith.constant 0 : index
    %c0_1 = arith.constant 0 : index
    %3 = vector.load %arg7[%c0, %c0_1] : memref<8x256xf32, #tpu.memory_space<vmem>>, vector<8x256xf32>
    %c0_2 = arith.constant 0 : index
    %c0_3 = arith.constant 0 : index
    %4 = vector.load %arg3[%c0_2, %c0_3] : memref<8x512xbf16, #tpu.memory_space<vmem>>, vector<8x512xbf16>
    %c0_4 = arith.constant 0 : index
    %c0_5 = arith.constant 0 : index
    %5 = vector.load %arg4[%c0_4, %c0_5] : memref<512x256xbf16, #tpu.memory_space<vmem>>, vector<512x256xbf16>
    %cst = arith.constant dense<0.000000e+00> : vector<8x256xf32>
    %6 = tpu.matmul %4, %5, %cst {dimension_numbers = #tpu.dot_dimension_numbers<[1], [0], [0], [1], [0, 0, 1, 1], [], []>} : vector<8x512xbf16>, vector<512x256xbf16>, vector<8x256xf32> -> vector<8x256xf32>
    %7 = arith.addf %3, %6 : vector<8x256xf32>
    %c0_6 = arith.constant 0 : index
    %c0_7 = arith.constant 0 : index
    %8 = vector.load %arg7[%c0_6, %c0_7] : memref<8x256xf32, #tpu.memory_space<vmem>>, vector<8x256xf32>
    tpu.vector_store %arg7[%c0_6, %c0_7], %7 {strides = array<i32>} : memref<8x256xf32, #tpu.memory_space<vmem>>, vector<8x256xf32>,
    %c0_i32_8 = arith.constant 0 : i32
    %9 = arith.cmpi eq, %arg2, %c0_i32_8 : i32
    %10 = arith.extui %9 : i1 to i32
    %c0_i32_9 = arith.constant 0 : i32
    %11 = arith.cmpi ne, %10, %c0_i32_9 : i32
    scf.if %11 {
      %c0_10 = arith.constant 0 : index
      %c0_11 = arith.constant 0 : index
      %12 = vector.load %arg7[%c0_10, %c0_11] : memref<8x256xf32, #tpu.memory_space<vmem>>, vector<8x256xf32>
      %c0_12 = arith.constant 0 : index
      %c0_13 = arith.constant 0 : index
      %13 = vector.load %arg5[%c0_12, %c0_13] : memref<1x256xf32, #tpu.memory_space<vmem>>, vector<1x256xf32>
      %14 = vector.broadcast %13 : vector<1x256xf32> to vector<8x256xf32>
      %15 = arith.addf %12, %14 : vector<8x256xf32>
      %cst_14 = arith.constant 0.000000e+00 : f32
      %16 = vector.broadcast %cst_14 : f32 to vector<8x256xf32>
      %17 = arith.maximumf %15, %16 : vector<8x256xf32>
      %c0_15 = arith.constant 0 : index
      %c0_16 = arith.constant 0 : index
      %18 = vector.load %arg6[%c0_15, %c0_16] : memref<8x256xf32, #tpu.memory_space<vmem>>, vector<8x256xf32>
      tpu.vector_store %arg6[%c0_15, %c0_16], %17 {strides = array<i32>} : memref<8x256xf32, #tpu.memory_space<vmem>>, vector<8x256xf32>,
    } else {
    }
    return
  }
  func.func @transform_0(%arg0: i32, %arg1: i32, %arg2: i32) -> (i32, i32) {
    %c0_i32 = arith.constant 0 : i32
    return %arg0, %arg2 : i32, i32
  }
  func.func @transform_1(%arg0: i32, %arg1: i32, %arg2: i32) -> (i32, i32) {
    %c0_i32 = arith.constant 0 : i32
    return %arg2, %arg1 : i32, i32
  }
  func.func @transform_2(%arg0: i32, %arg1: i32, %arg2: i32) -> (i32, i32) {
    %c0_i32 = arith.constant 0 : i32
    %c0_i32_0 = arith.constant 0 : i32
    return %c0_i32, %arg1 : i32, i32
  }
  func.func @transform_3(%arg0: i32, %arg1: i32, %arg2: i32) -> (i32, i32) {
    %c0_i32 = arith.constant 0 : i32
    return %arg0, %arg1 : i32, i32
  }
}

</mosaic_0001>

<llo_original>
// kernel: fc_forward.1
$region0: #{fc_forward.1}
  #allocation0 [shape = 'u32[]', space=smem, size = 0x4, offset = 0x4, fixed_abs, tag = 'smem constant byte address 0x4 - core index']
  #allocation1 [shape = 'u32[144,128]{1,0:T(1,128)}', space=vmem, size = 0x12000, scoped, tag = 'internal scratch']
  #allocation2 [shape = 'f32[8,256]{1,0:T(8,128)}', space=vmem, size = 0x2000, scoped, tag = 'scratch operand']
  %s0 = inlined_call_operand.vmem [shape: bf16[8,512], index: 0, kind: input, shape index: {}]
  %s1 = inlined_call_operand.vmem [shape: bf16[512,256], index: 1, kind: input, shape index: {}]
  %s2 = inlined_call_operand.vmem [shape: f32[1,256], index: 2, kind: input, shape index: {}]
  %s3 = inlined_call_operand.vmem [shape: f32[8,256], index: 3, kind: output, shape index: {}]
  %s4 = sld [smem:[#allocation0]]
  $region30: #{fc_forward.1} parent=0
    _
  %s6 = ssub.s32 1, %s4
  %s7 = scalar_select 0, %s6, %s4
  // Predicated region
  $region2: #{fc_forward.1} parent=0 // pred_check
    _
  $region3: #{fc_forward.1} parent=0 // pred_check_branch
    %9 = sbr.rel (0) target = $region5
  $region4: #{fc_forward.1} parent=0 // pred_region
    _
  $region5: #{fc_forward.1} parent=0 // pred_fallthru
    _
  // Predicated region
  $region6: #{fc_forward.1} parent=0 // pred_check
    _
  $region7: #{fc_forward.1} parent=0 // pred_check_branch
    %11 = sbr.rel (0) target = $region9
  $region8: #{fc_forward.1} parent=0 // pred_region
    _
  $region9: #{fc_forward.1} parent=0 // pred_fallthru
    _
  // Predicated region
  $region10: #{fc_forward.1} parent=0 // pred_check
    _
  $region11: #{fc_forward.1} parent=0 // pred_check_branch
    %13 = sbr.rel (0) target = $region13
  $region12: #{fc_forward.1} parent=0 // pred_region
    _
  $region13: #{fc_forward.1} parent=0 // pred_fallthru
    _
  %p14 = scmp.eq.s32.totalorder 0, 0
  // Predicated region
  $region14: #{fc_forward.1} parent=0 // pred_check
    %p15 = pneg %p14
  $region15: #{fc_forward.1} parent=0 // pred_check_branch
    %17 = sbr.rel (%p15) target = $region17
  $region16: #{fc_forward.1} parent=0 // pred_region
    %18 = vst [vmem:[#allocation2] sm:$0xff] 0.0
    %19 = vst [vmem:[#allocation2 + $0x8] sm:$0xff] 0.0
  $region17: #{fc_forward.1} parent=0 // pred_fallthru
    _
  %v20 = vld [vmem:[#allocation2] sm:$0xff]
  %v21 = vld [vmem:[#allocation2 + $0x8] sm:$0xff]
  %v22 = vld [vmem:[%s0] sm:$0xff]
  %v23 = vld [vmem:[%s0 + $0x8] sm:$0xff]
  %v24 = vld [vmem:[%s1] sm:$0xff]
  %v25 = vld [vmem:[%s1 + $0x8] sm:$0xff]
  %v26 = vld [vmem:[%s1 + $0x10] sm:$0xff]
  %v27 = vld [vmem:[%s1 + $0x18] sm:$0xff]
  %v28 = vld [vmem:[%s1 + $0x20] sm:$0xff]
  %v29 = vld [vmem:[%s1 + $0x28] sm:$0xff]
  %v30 = vld [vmem:[%s1 + $0x30] sm:$0xff]
  %v31 = vld [vmem:[%s1 + $0x38] sm:$0xff]
  %v32 = vld [vmem:[%s1 + $0x40] sm:$0xff]
  %v33 = vld [vmem:[%s1 + $0x48] sm:$0xff]
  %v34 = vld [vmem:[%s1 + $0x50] sm:$0xff]
  %v35 = vld [vmem:[%s1 + $0x58] sm:$0xff]
  %v36 = vld [vmem:[%s1 + $0x60] sm:$0xff]
  %v37 = vld [vmem:[%s1 + $0x68] sm:$0xff]
  %v38 = vld [vmem:[%s1 + $0x70] sm:$0xff]
  %v39 = vld [vmem:[%s1 + $0x78] sm:$0xff]
  %v40 = vld [vmem:[%s1 + $0x80] sm:$0xff]
  %v41 = vld [vmem:[%s1 + $0x88] sm:$0xff]
  %v42 = vld [vmem:[%s1 + $0x90] sm:$0xff]
  %v43 = vld [vmem:[%s1 + $0x98] sm:$0xff]
  %v44 = vld [vmem:[%s1 + $0xa0] sm:$0xff]
  %v45 = vld [vmem:[%s1 + $0xa8] sm:$0xff]
  %v46 = vld [vmem:[%s1 + $0xb0] sm:$0xff]
  %v47 = vld [vmem:[%s1 + $0xb8] sm:$0xff]
  %v48 = vld [vmem:[%s1 + $0xc0] sm:$0xff]
  %v49 = vld [vmem:[%s1 + $0xc8] sm:$0xff]
  %v50 = vld [vmem:[%s1 + $0xd0] sm:$0xff]
  %v51 = vld [vmem:[%s1 + $0xd8] sm:$0xff]
  %v52 = vld [vmem:[%s1 + $0xe0] sm:$0xff]
  %v53 = vld [vmem:[%s1 + $0xe8] sm:$0xff]
  %v54 = vld [vmem:[%s1 + $0xf0] sm:$0xff]
  %v55 = vld [vmem:[%s1 + $0xf8] sm:$0xff]
  %v56 = vld [vmem:[%s1 + $0x100] sm:$0xff]
  %v57 = vld [vmem:[%s1 + $0x108] sm:$0xff]
  %v58 = vld [vmem:[%s1 + $0x110] sm:$0xff]
  %v59 = vld [vmem:[%s1 + $0x118] sm:$0xff]
  %v60 = vld [vmem:[%s1 + $0x120] sm:$0xff]
  %v61 = vld [vmem:[%s1 + $0x128] sm:$0xff]
  %v62 = vld [vmem:[%s1 + $0x130] sm:$0xff]
  %v63 = vld [vmem:[%s1 + $0x138] sm:$0xff]
  %v64 = vld [vmem:[%s1 + $0x140] sm:$0xff]
  %v65 = vld [vmem:[%s1 + $0x148] sm:$0xff]
  %v66 = vld [vmem:[%s1 + $0x150] sm:$0xff]
  %v67 = vld [vmem:[%s1 + $0x158] sm:$0xff]
  %v68 = vld [vmem:[%s1 + $0x160] sm:$0xff]
  %v69 = vld [vmem:[%s1 + $0x168] sm:$0xff]
  %v70 = vld [vmem:[%s1 + $0x170] sm:$0xff]
  %v71 = vld [vmem:[%s1 + $0x178] sm:$0xff]
  %v72 = vld [vmem:[%s1 + $0x180] sm:$0xff]
  %v73 = vld [vmem:[%s1 + $0x188] sm:$0xff]
  %v74 = vld [vmem:[%s1 + $0x190] sm:$0xff]
  %v75 = vld [vmem:[%s1 + $0x198] sm:$0xff]
  %v76 = vld [vmem:[%s1 + $0x1a0] sm:$0xff]
  %v77 = vld [vmem:[%s1 + $0x1a8] sm:$0xff]
  %v78 = vld [vmem:[%s1 + $0x1b0] sm:$0xff]
  %v79 = vld [vmem:[%s1 + $0x1b8] sm:$0xff]
  %v80 = vld [vmem:[%s1 + $0x1c0] sm:$0xff]
  %v81 = vld [vmem:[%s1 + $0x1c8] sm:$0xff]
  %v82 = vld [vmem:[%s1 + $0x1d0] sm:$0xff]
  %v83 = vld [vmem:[%s1 + $0x1d8] sm:$0xff]
  %v84 = vld [vmem:[%s1 + $0x1e0] sm:$0xff]
  %v85 = vld [vmem:[%s1 + $0x1e8] sm:$0xff]
  %v86 = vld [vmem:[%s1 + $0x1f0] sm:$0xff]
  %v87 = vld [vmem:[%s1 + $0x1f8] sm:$0xff]
  %v90 = vunpack.c.l.b16 %v22
  %v91 = vunpack.c.h.b16 %v22
  %v92 = vunpack.c.l.b16 %v23
  %v93 = vunpack.c.h.b16 %v23
  %v94 = vpack.c.b16 %v90, %v90
  %v95 = vpack.c.b16 %v91, %v91
  %v96 = vpack.c.b16 %v92, %v92
  %v97 = vpack.c.b16 %v93, %v93
  %v166 = vunpack.c.l.b16 %v24
  %v167 = vunpack.c.h.b16 %v24
  %v168 = vunpack.c.l.b16 %v25
  %v169 = vunpack.c.h.b16 %v25
  %v170 = vunpack.c.l.b16 %v26
  %v171 = vunpack.c.h.b16 %v26
  %v172 = vunpack.c.l.b16 %v27
  %v173 = vunpack.c.h.b16 %v27
  %v174 = vunpack.c.l.b16 %v28
  %v175 = vunpack.c.h.b16 %v28
  %v176 = vunpack.c.l.b16 %v29
  %v177 = vunpack.c.h.b16 %v29
  %v178 = vunpack.c.l.b16 %v30
  %v179 = vunpack.c.h.b16 %v30
  %v180 = vunpack.c.l.b16 %v31
  %v181 = vunpack.c.h.b16 %v31
  %v182 = vunpack.c.l.b16 %v32
  %v183 = vunpack.c.h.b16 %v32
  %v184 = vunpack.c.l.b16 %v33
  %v185 = vunpack.c.h.b16 %v33
  %v186 = vunpack.c.l.b16 %v34
  %v187 = vunpack.c.h.b16 %v34
  %v188 = vunpack.c.l.b16 %v35
  %v189 = vunpack.c.h.b16 %v35
  %v190 = vunpack.c.l.b16 %v36
  %v191 = vunpack.c.h.b16 %v36
  %v192 = vunpack.c.l.b16 %v37
  %v193 = vunpack.c.h.b16 %v37
  %v194 = vunpack.c.l.b16 %v38
  %v195 = vunpack.c.h.b16 %v38
  %v196 = vunpack.c.l.b16 %v39
  %v197 = vunpack.c.h.b16 %v39
  %v198 = vunpack.c.l.b16 %v40
  %v199 = vunpack.c.h.b16 %v40
  %v200 = vunpack.c.l.b16 %v41
  %v201 = vunpack.c.h.b16 %v41
  %v202 = vunpack.c.l.b16 %v42
  %v203 = vunpack.c.h.b16 %v42
  %v204 = vunpack.c.l.b16 %v43
  %v205 = vunpack.c.h.b16 %v43
  %v206 = vunpack.c.l.b16 %v44
  %v207 = vunpack.c.h.b16 %v44
  %v208 = vunpack.c.l.b16 %v45
  %v209 = vunpack.c.h.b16 %v45
  %v210 = vunpack.c.l.b16 %v46
  %v211 = vunpack.c.h.b16 %v46
  %v212 = vunpack.c.l.b16 %v47
  %v213 = vunpack.c.h.b16 %v47
  %v214 = vunpack.c.l.b16 %v48
  %v215 = vunpack.c.h.b16 %v48
  %v216 = vunpack.c.l.b16 %v49
  %v217 = vunpack.c.h.b16 %v49
  %v218 = vunpack.c.l.b16 %v50
  %v219 = vunpack.c.h.b16 %v50
  %v220 = vunpack.c.l.b16 %v51
  %v221 = vunpack.c.h.b16 %v51
  %v222 = vunpack.c.l.b16 %v52
  %v223 = vunpack.c.h.b16 %v52
  %v224 = vunpack.c.l.b16 %v53
  %v225 = vunpack.c.h.b16 %v53
  %v226 = vunpack.c.l.b16 %v54
  %v227 = vunpack.c.h.b16 %v54
  %v228 = vunpack.c.l.b16 %v55
  %v229 = vunpack.c.h.b16 %v55
  %v230 = vunpack.c.l.b16 %v56
  %v231 = vunpack.c.h.b16 %v56
  %v232 = vunpack.c.l.b16 %v57
  %v233 = vunpack.c.h.b16 %v57
  %v234 = vunpack.c.l.b16 %v58
  %v235 = vunpack.c.h.b16 %v58
  %v236 = vunpack.c.l.b16 %v59
  %v237 = vunpack.c.h.b16 %v59
  %v238 = vunpack.c.l.b16 %v60
  %v239 = vunpack.c.h.b16 %v60
  %v240 = vunpack.c.l.b16 %v61
  %v241 = vunpack.c.h.b16 %v61
  %v242 = vunpack.c.l.b16 %v62
  %v243 = vunpack.c.h.b16 %v62
  %v244 = vunpack.c.l.b16 %v63
  %v245 = vunpack.c.h.b16 %v63
  %v246 = vunpack.c.l.b16 %v64
  %v247 = vunpack.c.h.b16 %v64
  %v248 = vunpack.c.l.b16 %v65
  %v249 = vunpack.c.h.b16 %v65
  %v250 = vunpack.c.l.b16 %v66
  %v251 = vunpack.c.h.b16 %v66
  %v252 = vunpack.c.l.b16 %v67
  %v253 = vunpack.c.h.b16 %v67
  %v254 = vunpack.c.l.b16 %v68
  %v255 = vunpack.c.h.b16 %v68
  %v256 = vunpack.c.l.b16 %v69
  %v257 = vunpack.c.h.b16 %v69
  %v258 = vunpack.c.l.b16 %v70
  %v259 = vunpack.c.h.b16 %v70
  %v260 = vunpack.c.l.b16 %v71
  %v261 = vunpack.c.h.b16 %v71
  %v262 = vunpack.c.l.b16 %v72
  %v263 = vunpack.c.h.b16 %v72
  %v264 = vunpack.c.l.b16 %v73
  %v265 = vunpack.c.h.b16 %v73
  %v266 = vunpack.c.l.b16 %v74
  %v267 = vunpack.c.h.b16 %v74
  %v268 = vunpack.c.l.b16 %v75
  %v269 = vunpack.c.h.b16 %v75
  %v270 = vunpack.c.l.b16 %v76
  %v271 = vunpack.c.h.b16 %v76
  %v272 = vunpack.c.l.b16 %v77
  %v273 = vunpack.c.h.b16 %v77
  %v274 = vunpack.c.l.b16 %v78
  %v275 = vunpack.c.h.b16 %v78
  %v276 = vunpack.c.l.b16 %v79
  %v277 = vunpack.c.h.b16 %v79
  %v278 = vunpack.c.l.b16 %v80
  %v279 = vunpack.c.h.b16 %v80
  %v280 = vunpack.c.l.b16 %v81
  %v281 = vunpack.c.h.b16 %v81
  %v282 = vunpack.c.l.b16 %v82
  %v283 = vunpack.c.h.b16 %v82
  %v284 = vunpack.c.l.b16 %v83
  %v285 = vunpack.c.h.b16 %v83
  %v286 = vunpack.c.l.b16 %v84
  %v287 = vunpack.c.h.b16 %v84
  %v288 = vunpack.c.l.b16 %v85
  %v289 = vunpack.c.h.b16 %v85
  %v290 = vunpack.c.l.b16 %v86
  %v291 = vunpack.c.h.b16 %v86
  %v292 = vunpack.c.l.b16 %v87
  %v293 = vunpack.c.h.b16 %v87
  %v294 = vpack.c.b16 %v168, %v166
  %v295 = vpack.c.b16 %v169, %v167
  %v296 = vpack.c.b16 %v172, %v170
  %v297 = vpack.c.b16 %v173, %v171
  %v298 = vpack.c.b16 %v176, %v174
  %v299 = vpack.c.b16 %v177, %v175
  %v300 = vpack.c.b16 %v180, %v178
  %v301 = vpack.c.b16 %v181, %v179
  %v302 = vpack.c.b16 %v184, %v182
  %v303 = vpack.c.b16 %v185, %v183
  %v304 = vpack.c.b16 %v188, %v186
  %v305 = vpack.c.b16 %v189, %v187
  %v306 = vpack.c.b16 %v192, %v190
  %v307 = vpack.c.b16 %v193, %v191
  %v308 = vpack.c.b16 %v196, %v194
  %v309 = vpack.c.b16 %v197, %v195
  %v310 = vpack.c.b16 %v200, %v198
  %v311 = vpack.c.b16 %v201, %v199
  %v312 = vpack.c.b16 %v204, %v202
  %v313 = vpack.c.b16 %v205, %v203
  %v314 = vpack.c.b16 %v208, %v206
  %v315 = vpack.c.b16 %v209, %v207
  %v316 = vpack.c.b16 %v212, %v210
  %v317 = vpack.c.b16 %v213, %v211
  %v318 = vpack.c.b16 %v216, %v214
  %v319 = vpack.c.b16 %v217, %v215
  %v320 = vpack.c.b16 %v220, %v218
  %v321 = vpack.c.b16 %v221, %v219
  %v322 = vpack.c.b16 %v224, %v222
  %v323 = vpack.c.b16 %v225, %v223
  %v324 = vpack.c.b16 %v228, %v226
  %v325 = vpack.c.b16 %v229, %v227
  %v326 = vpack.c.b16 %v232, %v230
  %v327 = vpack.c.b16 %v233, %v231
  %v328 = vpack.c.b16 %v236, %v234
  %v329 = vpack.c.b16 %v237, %v235
  %v330 = vpack.c.b16 %v240, %v238
  %v331 = vpack.c.b16 %v241, %v239
  %v332 = vpack.c.b16 %v244, %v242
  %v333 = vpack.c.b16 %v245, %v243
  %v334 = vpack.c.b16 %v248, %v246
  %v335 = vpack.c.b16 %v249, %v247
  %v336 = vpack.c.b16 %v252, %v250
  %v337 = vpack.c.b16 %v253, %v251
  %v338 = vpack.c.b16 %v256, %v254
  %v339 = vpack.c.b16 %v257, %v255
  %v340 = vpack.c.b16 %v260, %v258
  %v341 = vpack.c.b16 %v261, %v259
  %v342 = vpack.c.b16 %v264, %v262
  %v343 = vpack.c.b16 %v265, %v263
  %v344 = vpack.c.b16 %v268, %v266
  %v345 = vpack.c.b16 %v269, %v267
  %v346 = vpack.c.b16 %v272, %v270
  %v347 = vpack.c.b16 %v273, %v271
  %v348 = vpack.c.b16 %v276, %v274
  %v349 = vpack.c.b16 %v277, %v275
  %v350 = vpack.c.b16 %v280, %v278
  %v351 = vpack.c.b16 %v281, %v279
  %v352 = vpack.c.b16 %v284, %v282
  %v353 = vpack.c.b16 %v285, %v283
  %v354 = vpack.c.b16 %v288, %v286
  %v355 = vpack.c.b16 %v289, %v287
  %v356 = vpack.c.b16 %v292, %v290
  %v357 = vpack.c.b16 %v293, %v291
  %422 = vmatprep.subr.bf16.mxu0 %v295
  %423 = vmatpush1.bf16.msra.mxu0 %v294
  %424 = vmatprep.subr.bf16.mxu0 %v297
  %425 = vmatpush1.bf16.msra.mxu0 %v296
  %426 = vmatprep.subr.bf16.mxu0 %v299
  %427 = vmatpush1.bf16.msra.mxu0 %v298
  %428 = vmatprep.subr.bf16.mxu0 %v301
  %429 = vmatpush1.bf16.msra.mxu0 %v300
  %430 = vmatprep.subr.bf16.mxu0 %v303
  %431 = vmatpush1.bf16.msra.mxu0 %v302
  %432 = vmatprep.subr.bf16.mxu0 %v305
  %433 = vmatpush1.bf16.msra.mxu0 %v304
  %434 = vmatprep.subr.bf16.mxu0 %v307
  %435 = vmatpush1.bf16.msra.mxu0 %v306
  %436 = vmatprep.subr.bf16.mxu0 %v309
  %437 = vmatpush1.bf16.msra.mxu0 %v308
  %438 = vmatprep.subr.bf16.mxu0 %v311
  %439 = vmatpush1.bf16.msra.mxu0 %v310
  %440 = vmatprep.subr.bf16.mxu0 %v313
  %441 = vmatpush1.bf16.msra.mxu0 %v312
  %442 = vmatprep.subr.bf16.mxu0 %v315
  %443 = vmatpush1.bf16.msra.mxu0 %v314
  %444 = vmatprep.subr.bf16.mxu0 %v317
  %445 = vmatpush1.bf16.msra.mxu0 %v316
  %446 = vmatprep.subr.bf16.mxu0 %v319
  %447 = vmatpush1.bf16.msra.mxu0 %v318
  %448 = vmatprep.subr.bf16.mxu0 %v321
  %449 = vmatpush1.bf16.msra.mxu0 %v320
  %450 = vmatprep.subr.bf16.mxu0 %v323
  %451 = vmatpush1.bf16.msra.mxu0 %v322
  %452 = vmatprep.subr.bf16.mxu0 %v325
  %453 = vmatpush1.bf16.msra.mxu0 %v324
  %454 = vmatprep.mubr.bf16.mxu0 %v95
  %455 = vmatmul.mubr.bf16.gmra.mrb[0].mxu0 %v94
  %v456 = vpop.f32.mrb[0].mxu0
  %v457 = vadd.f32 0.0, %v456
  %v458 = vpop.f32.mrb[0].mxu0
  %v459 = vadd.f32 0.0, %v458
  %v460 = vpop.f32.mrb[0].mxu0
  %v461 = vpop.f32.mrb[0].mxu0
  %462 = vdwg.mxu0
  %463 = vmatprep.subr.bf16.mxu0 %v327
  %464 = vmatpush1.bf16.msra.mxu0 %v326
  %465 = vmatprep.subr.bf16.mxu0 %v329
  %466 = vmatpush1.bf16.msra.mxu0 %v328
  %467 = vmatprep.subr.bf16.mxu0 %v331
  %468 = vmatpush1.bf16.msra.mxu0 %v330
  %469 = vmatprep.subr.bf16.mxu0 %v333
  %470 = vmatpush1.bf16.msra.mxu0 %v332
  %471 = vmatprep.subr.bf16.mxu0 %v335
  %472 = vmatpush1.bf16.msra.mxu0 %v334
  %473 = vmatprep.subr.bf16.mxu0 %v337
  %474 = vmatpush1.bf16.msra.mxu0 %v336
  %475 = vmatprep.subr.bf16.mxu0 %v339
  %476 = vmatpush1.bf16.msra.mxu0 %v338
  %477 = vmatprep.subr.bf16.mxu0 %v341
  %478 = vmatpush1.bf16.msra.mxu0 %v340
  %479 = vmatprep.subr.bf16.mxu0 %v343
  %480 = vmatpush1.bf16.msra.mxu0 %v342
  %481 = vmatprep.subr.bf16.mxu0 %v345
  %482 = vmatpush1.bf16.msra.mxu0 %v344
  %483 = vmatprep.subr.bf16.mxu0 %v347
  %484 = vmatpush1.bf16.msra.mxu0 %v346
  %485 = vmatprep.subr.bf16.mxu0 %v349
  %486 = vmatpush1.bf16.msra.mxu0 %v348
  %487 = vmatprep.subr.bf16.mxu0 %v351
  %488 = vmatpush1.bf16.msra.mxu0 %v350
  %489 = vmatprep.subr.bf16.mxu0 %v353
  %490 = vmatpush1.bf16.msra.mxu0 %v352
  %491 = vmatprep.subr.bf16.mxu0 %v355
  %492 = vmatpush1.bf16.msra.mxu0 %v354
  %493 = vmatprep.subr.bf16.mxu0 %v357
  %494 = vmatpush1.bf16.msra.mxu0 %v356
  %495 = vmatprep.mubr.bf16.mxu0 %v97
  %496 = vmatmul.mubr.bf16.gmra.mrb[0].mxu0 %v96
  %v497 = vpop.f32.mrb[0].mxu0
  %v498 = vadd.f32 %v457, %v497
  %v499 = vpop.f32.mrb[0].mxu0
  %v500 = vadd.f32 %v459, %v499
  %v501 = vpop.f32.mrb[0].mxu0
  %v502 = vpop.f32.mrb[0].mxu0
  %503 = vdwg.mxu0
  %v504 = vadd.f32 %v20, %v498
  %v505 = vadd.f32 %v21, %v500
  %506 = vst [vmem:[#allocation2] sm:$0xff] %v504
  %507 = vst [vmem:[#allocation2 + $0x8] sm:$0xff] %v505
  // Predicated region
  $region18: #{fc_forward.1} parent=0 // pred_check
    %p508 = pneg %p14
  $region19: #{fc_forward.1} parent=0 // pred_check_branch
    %510 = sbr.rel (%p508) target = $region21
  $region20: #{fc_forward.1} parent=0 // pred_region
    %v511 = vld [vmem:[#allocation2] sm:$0xff]
    %v512 = vld [vmem:[#allocation2 + $0x8] sm:$0xff]
    %v513 = vld [vmem:[%s2] sm:$0x3]
    %v515 = vlaneseq
    %v516 = vshrl.u32 %v515, 7
    %v517 = vsub.s32 0, %v516
    %v518 = vrot.slane %v513, %v517
    %v519 = vlaneseq
    %v520 = vshrl.u32 %v519, 7
    %v521 = vsub.s32 1, %v520
    %v522 = vrot.slane %v513, %v521
    %v525 = vadd.f32 %v511, %v518
    %v526 = vadd.f32 %v512, %v522
    %v527 = vmax.f32 %v525, 0.0
    %v528 = vmax.f32 %v526, 0.0
    %529 = vst [vmem:[%s3] sm:$0xff] %v527
    %530 = vst [vmem:[%s3 + $0x8] sm:$0xff] %v528
  $region21: #{fc_forward.1} parent=0 // pred_fallthru
    _
  // Predicated region
  $region22: #{fc_forward.1} parent=0 // pred_check
    _
  $region23: #{fc_forward.1} parent=0 // pred_check_branch
    %532 = sbr.rel (0) target = $region25
  $region24: #{fc_forward.1} parent=0 // pred_region
    _
  $region25: #{fc_forward.1} parent=0 // pred_fallthru
    _
  // Predicated region
  $region26: #{fc_forward.1} parent=0 // pred_check
    _
  $region27: #{fc_forward.1} parent=0 // pred_check_branch
    %534 = sbr.rel (0) target = $region29
  $region28: #{fc_forward.1} parent=0 // pred_region
    _
  $region29: #{fc_forward.1} parent=0 // pred_fallthru
    _

</llo_original>
